<compile_context>
chip_gen: v7x
topology: tpu7x:2x2x1
jax: 0.10.0
libtpu: 0.0.40
codegen_flags: <defaults>
</compile_context>

<pallas_src>
import functools

import jax
import jax.numpy as jnp
from jax.experimental import pallas as pl
from jax.experimental.pallas import tpu as pltpu

_LANE = 128
_EPS2 = 1e-24              # (1e-12)^2 : torch F.normalize eps, squared (f32-safe)
_BF16_CAST_MIN_D = 2048    # cast f32 matmul operands to bf16 above this D


def _round_up(x, m):
    return ((x + m - 1) // m) * m


def _pick_tiles(nq, wp, d, itemsize, dtype):
    min_t = 16 if dtype == jnp.bfloat16 else 8
    # W tile: keep the whole proto block resident across Nq-tiles when small.
    if wp <= 512 and wp * d * itemsize <= (2 << 20):
        tw = wp
    elif wp % 256 == 0 and 256 * d * itemsize <= (2 << 20):
        tw = 256
    else:
        tw = _LANE
    # Nq tile: minimal padding among power-of-two candidates, prefer larger.
    cands = [t for t in (256, 128, 64, 32, 16, 8) if t >= min_t]
    tq = min(cands, key=lambda t: (_round_up(nq, t) - nq, -t))
    # Keep the double-buffered working set well under the scoped-VMEM default.
    while tq > min_t and 2 * (tq + tw) * d * itemsize + 2 * tq * tw * 4 > (12 << 20):
        tq //= 2
    return tq, tw, min_t


def _maybe_split_rows(nq, tq, min_t, other_steps):
    """v7x has 2 TensorCores: make sure a would-be 1-step grid gets >=2 steps."""
    row_steps = _round_up(nq, tq) // tq
    if other_steps * row_steps == 1 and nq >= 2 * min_t:
        tq = _round_up(-(-nq // 2), min_t)
    return tq


# ----------------------------------------------------------------------------
# Euclidean kernel: out = (2/T) * q.p - |q|^2/T - |p|^2/T   (2-D tiles)
# Row norms (already scaled by 1/T) arrive precomputed: qsq (tq,1), psq (1,tw).
# ----------------------------------------------------------------------------
def _euclid_kernel(inv_t_ref, q_ref, p_ref, qsq_ref, psq_ref, o_ref, *, cast_bf16):
    q = q_ref[...]                                   # (tq, D) native dtype
    p = p_ref[...]                                   # (tw, D)
    if cast_bf16:                                    # static flag (large-D f32 only)
        q = q.astype(jnp.bfloat16)
        p = p.astype(jnp.bfloat16)
    qp = jax.lax.dot_general(                        # MXU, f32 acc, qd,wd->qw
        q, p, (((1,), (1,)), ((), ())),
        preferred_element_type=jnp.float32)          # (tq, tw)
    two_inv_t = 2.0 * inv_t_ref[0, 0]                # runtime scalar from SMEM
    # Note: the expansion can yield tiny positive values where the exact
    # diff-squared form is 0; acceptable vs. stated tolerances.
    o_ref[...] = (two_inv_t * qp - qsq_ref[...] - psq_ref[...]).astype(o_ref.dtype)


@jax.jit
def proto_euclidean(query, proto, temperature=1.0):
    B, Nq, D = query.shape
    _, W, _ = proto.shape
    itemsize = query.dtype.itemsize
    cast_bf16 = (query.dtype == jnp.float32) and (D >= _BF16_CAST_MIN_D)

    Wp = _round_up(W, _LANE)
    tq, tw, min_t = _pick_tiles(Nq, Wp, D, itemsize, query.dtype)
    tq = _maybe_split_rows(Nq, tq, min_t, other_steps=B * (Wp // tw))
    Nqp = _round_up(Nq, tq)

    q_in = query if Nqp == Nq else jnp.pad(query, ((0, 0), (0, Nqp - Nq), (0, 0)))
    p_in = proto if Wp == W else jnp.pad(proto, ((0, 0), (0, Wp - W), (0, 0)))

    inv_t = (1.0 / jnp.asarray(temperature, jnp.float32)).reshape(1, 1)
    # Hoisted row norms (scaled by 1/T): tiny sublane-/lane-dense side inputs.
    qf = q_in.astype(jnp.float32)
    pf = p_in.astype(jnp.float32)
    q_sq = jnp.sum(qf * qf, axis=-1, keepdims=True) * inv_t[0, 0]      # (B, Nqp, 1)
    p_sq = (jnp.sum(pf * pf, axis=-1) * inv_t[0, 0])[:, None, :]       # (B, 1, Wp)

    kernel = functools.partial(_euclid_kernel, cast_bf16=cast_bf16)
    out = pl.pallas_call(
        kernel,
        out_shape=jax.ShapeDtypeStruct((B, Nqp, Wp), query.dtype),
        grid_spec=pltpu.PrefetchScalarGridSpec(
            num_scalar_prefetch=0,
            grid=(B, Nqp // tq, Wp // tw),
            in_specs=[
                pl.BlockSpec(memory_space=pltpu.MemorySpace.SMEM),              # 1/T
                pl.BlockSpec((pl.Squeezed(), tq, D), lambda b, i, j: (b, i, 0)),  # q
                pl.BlockSpec((pl.Squeezed(), tw, D), lambda b, i, j: (b, j, 0)),  # p
                pl.BlockSpec((pl.Squeezed(), tq, 1), lambda b, i, j: (b, i, 0)),  # |q|^2/T
                pl.BlockSpec((pl.Squeezed(), 1, tw), lambda b, i, j: (b, 0, j)),  # |p|^2/T
            ],
            out_specs=pl.BlockSpec((pl.Squeezed(), tq, tw),
                                   lambda b, i, j: (b, i, j)),
        ),
        compiler_params=pltpu.CompilerParams(
            dimension_semantics=("parallel", "parallel", "parallel")),
    )(inv_t, q_in, p_in, q_sq, p_sq)
    return out[:, :Nq, :W]


# ----------------------------------------------------------------------------
# Cosine kernel: out = dot(q, p^T) * [rsqrt(|q|^2)/T] * rsqrt(|p|^2)
# Inverse norms arrive precomputed: qn (tq,1) carries the 1/T factor, pn (1,tw).
# ----------------------------------------------------------------------------
def _cos_kernel(q_ref, p_ref, qn_ref, pn_ref, o_ref, *, cast_bf16):
    q = q_ref[...]                                   # (tq, D)
    p = p_ref[...]                                   # (tw, D)
    if cast_bf16:
        q = q.astype(jnp.bfloat16)
        p = p.astype(jnp.bfloat16)
    sim = jax.lax.dot_general(                       # MXU, f32 acc
        q, p, (((1,), (1,)), ((), ())),
        preferred_element_type=jnp.float32)          # (tq, tw)
    o_ref[...] = (sim * qn_ref[...] * pn_ref[...]).astype(o_ref.dtype)


@jax.jit
def proto_cos_sim(query, proto, temperature=1.0):
    Nq, D = query.shape
    W, _ = proto.shape
    itemsize = query.dtype.itemsize
    cast_bf16 = (query.dtype == jnp.float32) and (D >= _BF16_CAST_MIN_D)

    Wp = _round_up(W, _LANE)
    tq, tw, min_t = _pick_tiles(Nq, Wp, D, itemsize, query.dtype)
    tq = _maybe_split_rows(Nq, tq, min_t, other_steps=Wp // tw)
    Nqp = _round_up(Nq, tq)

    q_in = query if Nqp == Nq else jnp.pad(query, ((0, Nqp - Nq), (0, 0)))
    p_in = proto if Wp == W else jnp.pad(proto, ((0, Wp - W), (0, 0)))

    inv_t = 1.0 / jnp.asarray(temperature, jnp.float32)
    qf = q_in.astype(jnp.float32)
    pf = p_in.astype(jnp.float32)
    # max(sumsq, eps^2) matches torch F.normalize's max(norm, eps) semantics.
    inv_qn = jax.lax.rsqrt(
        jnp.maximum(jnp.sum(qf * qf, axis=-1, keepdims=True), _EPS2)) * inv_t   # (Nqp,1)
    inv_pn = jax.lax.rsqrt(
        jnp.maximum(jnp.sum(pf * pf, axis=-1), _EPS2))[None, :]                 # (1,Wp)

    kernel = functools.partial(_cos_kernel, cast_bf16=cast_bf16)
    out = pl.pallas_call(
        kernel,
        out_shape=jax.ShapeDtypeStruct((Nqp, Wp), query.dtype),
        grid_spec=pltpu.PrefetchScalarGridSpec(
            num_scalar_prefetch=0,
            grid=(Nqp // tq, Wp // tw),
            in_specs=[
                pl.BlockSpec((tq, D), lambda i, j: (i, 0)),
                pl.BlockSpec((tw, D), lambda i, j: (j, 0)),
                pl.BlockSpec((tq, 1), lambda i, j: (i, 0)),
                pl.BlockSpec((1, tw), lambda i, j: (0, j)),
            ],
            out_specs=pl.BlockSpec((tq, tw), lambda i, j: (i, j)),
        ),
        compiler_params=pltpu.CompilerParams(
            dimension_semantics=("parallel", "parallel")),
    )(q_in, p_in, inv_qn, inv_pn)
    return out[:Nq, :W]


# ----------------------------------------------------------------------------
# ProtoLayer wrapper mirroring the torch module's forward().
# ----------------------------------------------------------------------------
class ProtoLayer:
    def __init__(self, way_num, shot_num, query_num):
        self.way_num = way_num
        self.shot_num = shot_num
        self.query_num = query_num

    def __call__(self, query, proto, mode='euclidean', temperature=1.0):
        if mode == 'euclidean':
            return proto_euclidean(query, proto, temperature)
        elif mode == 'cos_sim':
            return proto_cos_sim(query, proto, temperature)
        raise KeyError(mode)


# ----------------------------------------------------------------------------
# Pure-JAX references (mirror the torch lambdas) for correctness checks.
# ----------------------------------------------------------------------------
def _ref_euclidean(q, p, temperature):
    diff = q[:, :, None, :] - p[:, None, :, :]
    return -jnp.sum(diff * diff, axis=3) / temperature


def _ref_cos_sim(q, p, temperature):
    eps = 1e-12
    qn = q / jnp.maximum(jnp.linalg.norm(q, axis=-1, keepdims=True), eps)
    pn = p / jnp.maximum(jnp.linalg.norm(p, axis=-1, keepdims=True), eps)
    return (qn @ pn.T) / temperature


if __name__ == "__main__":
    # Small few-shot episode: way=4, shot=1, query_num=4, feature dim D=64.
    way_num, shot_num, query_num = 4, 1, 4
    B = 2                      # episodes (euclidean path is batched)
    Nq = way_num * query_num   # 16 query samples per episode
    D = 64                     # embedding dim
    temperature = 2.0

    key = jax.random.PRNGKey(0)
    kq, kp = jax.random.split(key)
    query_b = jax.random.normal(kq, (B, Nq, D), dtype=jnp.float32)
    proto_b = jax.random.normal(kp, (B, way_num, D), dtype=jnp.float32)

    layer = ProtoLayer(way_num, shot_num, query_num)

    # euclidean mode (batched episodes)
    out_euc = jax.block_until_ready(
        layer(query_b, proto_b, mode='euclidean', temperature=temperature))
    ref_euc = _ref_euclidean(query_b, proto_b, temperature)
    assert out_euc.shape == (B, Nq, way_num)
    assert jnp.allclose(out_euc, ref_euc, rtol=1e-4, atol=1e-3), "euclidean mismatch"

    # euclidean again with a different temperature (exercises the no-recompile path)
    out_euc2 = jax.block_until_ready(
        layer(query_b, proto_b, mode='euclidean', temperature=0.5))
    ref_euc2 = _ref_euclidean(query_b, proto_b, 0.5)
    assert jnp.allclose(out_euc2, ref_euc2, rtol=1e-4, atol=1e-3), "euclidean T mismatch"

    # cos_sim mode (torch.mm path is 2-D: single episode)
    out_cos = jax.block_until_ready(
        layer(query_b[0], proto_b[0], mode='cos_sim', temperature=temperature))
    ref_cos = _ref_cos_sim(query_b[0], proto_b[0], temperature)
    assert out_cos.shape == (Nq, way_num)
    assert jnp.allclose(out_cos, ref_cos, rtol=1e-4, atol=1e-5), "cos_sim mismatch"

    print("KERNEL_OK")
</pallas_src>

<mosaic_0001>
module attributes {stable_mosaic.version = 11 : i64} {
  func.func @_euclid_kernel(%arg0: i32, %arg1: i32, %arg2: i32, %arg3: memref<1x1xf32, #tpu.memory_space<smem>>, %arg4: memref<1x16x64xf32, #tpu.memory_space<vmem>>, %arg5: memref<1x128x64xf32, #tpu.memory_space<vmem>>, %arg6: memref<1x16x1xf32, #tpu.memory_space<vmem>>, %arg7: memref<1x1x128xf32, #tpu.memory_space<vmem>>, %arg8: memref<1x16x128xf32, #tpu.memory_space<vmem>>) attributes {dimension_semantics = [#tpu.dimension_semantics<parallel>, #tpu.dimension_semantics<parallel>, #tpu.dimension_semantics<parallel>], iteration_bounds = array<i64: 2, 1, 1>, scalar_prefetch = 0 : i64, scratch_operands = 0 : i64, tpu.core_type = #tpu.core_type<tc>, window_params = [{transform_indices = @transform_0, window_bounds = array<i64: 1, 1>}, {transform_indices = @transform_1, window_bounds = array<i64: 1, 16, 64>}, {transform_indices = @transform_2, window_bounds = array<i64: 1, 128, 64>}, {transform_indices = @transform_3, window_bounds = array<i64: 1, 16, 1>}, {transform_indices = @transform_4, window_bounds = array<i64: 1, 1, 128>}, {transform_indices = @transform_5, window_bounds = array<i64: 1, 16, 128>}]} {
    %c0 = arith.constant 0 : index
    %c0_0 = arith.constant 0 : index
    %c0_1 = arith.constant 0 : index
    %0 = vector.load %arg4[%c0, %c0_0, %c0_1] : memref<1x16x64xf32, #tpu.memory_space<vmem>>, vector<1x16x64xf32>
    %1 = vector.shape_cast %0 : vector<1x16x64xf32> to vector<16x64xf32>
    %c0_2 = arith.constant 0 : index
    %c0_3 = arith.constant 0 : index
    %c0_4 = arith.constant 0 : index
    %2 = vector.load %arg5[%c0_2, %c0_3, %c0_4] : memref<1x128x64xf32, #tpu.memory_space<vmem>>, vector<1x128x64xf32>
    %3 = vector.shape_cast %2 : vector<1x128x64xf32> to vector<128x64xf32>
    %cst = arith.constant dense<0.000000e+00> : vector<16x128xf32>
    %4 = tpu.matmul %1, %3, %cst {dimension_numbers = #tpu.dot_dimension_numbers<[1], [1], [0], [0], [0, 0, 1, 0], [], []>} : vector<16x64xf32>, vector<128x64xf32>, vector<16x128xf32> -> vector<16x128xf32>
    %c0_5 = arith.constant 0 : index
    %c0_6 = arith.constant 0 : index
    %5 = memref.load %arg3[%c0_5, %c0_6] : memref<1x1xf32, #tpu.memory_space<smem>>
    %cst_7 = arith.constant 2.000000e+00 : f32
    %6 = arith.mulf %cst_7, %5 : f32
    %7 = vector.broadcast %6 : f32 to vector<16x128xf32>
    %8 = arith.mulf %7, %4 : vector<16x128xf32>
    %c0_8 = arith.constant 0 : index
    %c0_9 = arith.constant 0 : index
    %c0_10 = arith.constant 0 : index
    %9 = vector.load %arg6[%c0_8, %c0_9, %c0_10] : memref<1x16x1xf32, #tpu.memory_space<vmem>>, vector<1x16x1xf32>
    %10 = vector.shape_cast %9 : vector<1x16x1xf32> to vector<16x1xf32>
    %11 = vector.broadcast %10 : vector<16x1xf32> to vector<16x128xf32>
    %12 = arith.subf %8, %11 : vector<16x128xf32>
    %c0_11 = arith.constant 0 : index
    %c0_12 = arith.constant 0 : index
    %c0_13 = arith.constant 0 : index
    %13 = vector.load %arg7[%c0_11, %c0_12, %c0_13] : memref<1x1x128xf32, #tpu.memory_space<vmem>>, vector<1x1x128xf32>
    %14 = vector.shape_cast %13 : vector<1x1x128xf32> to vector<1x128xf32>
    %15 = vector.broadcast %14 : vector<1x128xf32> to vector<16x128xf32>
    %16 = arith.subf %12, %15 : vector<16x128xf32>
    %c0_14 = arith.constant 0 : index
    %c0_15 = arith.constant 0 : index
    %c0_16 = arith.constant 0 : index
    %17 = vector.load %arg8[%c0_14, %c0_15, %c0_16] : memref<1x16x128xf32, #tpu.memory_space<vmem>>, vector<1x16x128xf32>
    %18 = vector.shape_cast %17 : vector<1x16x128xf32> to vector<16x128xf32>
    %19 = vector.shape_cast %16 : vector<16x128xf32> to vector<1x16x128xf32>
    tpu.vector_store %arg8[%c0_14, %c0_15, %c0_16], %19 {strides = array<i32>} : memref<1x16x128xf32, #tpu.memory_space<vmem>>, vector<1x16x128xf32>,
    return
  }
  func.func @transform_0(%arg0: i32, %arg1: i32, %arg2: i32) -> (i32, i32) {
    %c0_i32 = arith.constant 0 : i32
    %c0_i32_0 = arith.constant 0 : i32
    %c0_i32_1 = arith.constant 0 : i32
    return %c0_i32, %c0_i32_0 : i32, i32
  }
  func.func @transform_1(%arg0: i32, %arg1: i32, %arg2: i32) -> (i32, i32, i32) {
    %c0_i32 = arith.constant 0 : i32
    %c0_i32_0 = arith.constant 0 : i32
    return %arg0, %arg1, %c0_i32 : i32, i32, i32
  }
  func.func @transform_2(%arg0: i32, %arg1: i32, %arg2: i32) -> (i32, i32, i32) {
    %c0_i32 = arith.constant 0 : i32
    %c0_i32_0 = arith.constant 0 : i32
    return %arg0, %arg2, %c0_i32 : i32, i32, i32
  }
  func.func @transform_3(%arg0: i32, %arg1: i32, %arg2: i32) -> (i32, i32, i32) {
    %c0_i32 = arith.constant 0 : i32
    %c0_i32_0 = arith.constant 0 : i32
    return %arg0, %arg1, %c0_i32 : i32, i32, i32
  }
  func.func @transform_4(%arg0: i32, %arg1: i32, %arg2: i32) -> (i32, i32, i32) {
    %c0_i32 = arith.constant 0 : i32
    %c0_i32_0 = arith.constant 0 : i32
    return %arg0, %c0_i32, %arg2 : i32, i32, i32
  }
  func.func @transform_5(%arg0: i32, %arg1: i32, %arg2: i32) -> (i32, i32, i32) {
    %c0_i32 = arith.constant 0 : i32
    return %arg0, %arg1, %arg2 : i32, i32, i32
  }
}

</mosaic_0001>

<llo_original>
// kernel: proto_euclidean.1
$region0: #{proto_euclidean.1}
  #allocation0 [shape = 'u32[]', space=smem, size = 0x4, offset = 0x4, fixed_abs, tag = 'smem constant byte address 0x4 - core index']
  #allocation1 [shape = 'u32[144,128]{1,0:T(1,128)}', space=vmem, size = 0x12000, scoped, tag = 'internal scratch']
  #allocation2 [shape = 'f32[1,1]{1,0:T(1,128)S(6)}', space=smem, size = 0x200, scoped, tag = 'scoped memory for proto_euclidean.1']
  %s0 = inlined_call_operand.<no memory space> [shape: f32[1,1], index: 0, kind: input, shape index: {}]
  %s1 = inlined_call_operand.vmem [shape: f32[2,16,64], index: 1, kind: input, shape index: {}]
  %s2 = inlined_call_operand.vmem [shape: f32[2,128,64], index: 2, kind: input, shape index: {}]
  %s3 = inlined_call_operand.vmem [shape: f32[2,16,1], index: 3, kind: input, shape index: {}]
  %s4 = inlined_call_operand.vmem [shape: f32[2,1,128], index: 4, kind: input, shape index: {}]
  %s5 = inlined_call_operand.vmem [shape: f32[2,16,128], index: 5, kind: output, shape index: {}]
  %s6 = sld [smem:[#allocation0]]
  $region53: #{proto_euclidean.1} parent=0
    _
  %s8 = ssub.s32 1, %s6
  %s9 = scalar_select 0, %s8, %s6
  %10 = sst [smem:[#allocation2]] %s0
  loop: start=0, step=1, limit=4
  $region2: #{proto_euclidean.1} parent=0 // loop_pre_header
    _
  $region3: #{proto_euclidean.1} parent=0 // loop_header
    %s12 = sphi 0, %s16
    %p13 = scmp.ge.s32.totalorder %s12, 4
    %s19 = sphi 0, %s38
    %s20 = sphi 0, %s34
    %s21 = sphi 0, %s30
    %s22 = sphi 0, %s19
    %s23 = sphi 0, %s20
    %s24 = sphi 0, %s21
    %s25 = sphi 0, %s22
    %s26 = sphi 0, %s23
    %s27 = sphi 0, %s24
    %s39 = sphi 0, %s39
    %s41 = sphi 0, %s39
    %s42 = sphi 0, %s41
    %s56 = sphi 0, %s42
    %s64 = sphi 0, %s66
    %s67 = sphi 0, %s64
    %s68 = sphi 0, %s67
    %s84 = sphi 0, %s68
    %s92 = sphi 0, %s94
    %s95 = sphi 0, %s92
    %s96 = sphi 0, %s95
    %s112 = sphi 0, %s96
    %s120 = sphi 0, %s122
    %s123 = sphi 0, %s120
    %s124 = sphi 0, %s123
    %s140 = sphi 0, %s124
    %s148 = sphi 0, %s150
    %s151 = sphi 0, %s148
    %s152 = sphi 0, %s151
    %s168 = sphi 0, %s152
    %s178 = sphi 0, %s180
    %s181 = sphi 0, %s178
    %s182 = sphi 0, %s181
    %s198 = sphi 0, %s182
  $region4: #{proto_euclidean.1} parent=0 // loop_header_branch
    %15 = sbr.rel (%p13) target = $region8
  $region5: #{proto_euclidean.1} parent=0 // loop_body
    %s17 = ssub.s32 %s12, 1
    %s18 = ssub.s32 %s12, 2
    %s28 = sadd.s32 1, %s21
    %p29 = scmp.ge.s32.totalorder %s28, 1
    %s30 = scalar_select %p29, 0, %s28
    %s31 = sadd.s32 1, %s20
    %s32 = scalar_select %p29, %s31, %s20
    %p33 = scmp.ge.s32.totalorder %s32, 1
    %s34 = scalar_select %p33, 0, %s32
    %s35 = sadd.s32 1, %s19
    %s36 = scalar_select %p33, %s35, %s19
    %p37 = scmp.ge.s32.totalorder %s36, 2
    %s38 = scalar_select %p37, 0, %s36
    %s40 = sadd.s32 %s39, 1
    %p43 = scmp.eq.s32.totalorder %s12, 1
    %p44 = scmp.ne.s32.totalorder %s39, %s41
    %p45 = scmp.eq.s32.totalorder %s12, 0
    %p46 = por %p44, %p45
    %p47 = scmp.ne.s32.totalorder %s39, %s41
    %p48 = scmp.eq.s32.totalorder %s17, 1
    %p49 = por %p47, %p48
    %p50 = scmp.ne.s32.totalorder %s41, %s42
    %p51 = scmp.eq.s32.totalorder %s17, 0
    %p52 = por %p50, %p51
    %p53 = scmp.ne.s32.totalorder %s41, %s42
    %p54 = scmp.eq.s32.totalorder %s18, 1
    %p55 = por %p53, %p54
    %p57 = scmp.ne.s32.totalorder %s42, %s56
    %p58 = scmp.eq.s32.totalorder %s18, 0
    %p59 = por %p57, %p58
    %s60 = ssub.s32 %s19, %s38
    %s61 = ssub.s32 %s20, %s34
    %s62 = sor.u32 %s60, %s61
    %p63 = scmp.eq.s32.totalorder %s62, 0
    %s65 = sadd.s32 %s64, 1
    %s66 = scalar_select %p63, %s64, %s65
    %p69 = pneg %p63
    %p70 = scmp.eq.s32.totalorder %s12, 1
    %p71 = por %p69, %p70
    %p72 = scmp.ne.s32.totalorder %s64, %s67
    %p73 = scmp.eq.s32.totalorder %s12, 0
    %p74 = por %p72, %p73
    %p75 = scmp.ne.s32.totalorder %s64, %s67
    %p76 = scmp.eq.s32.totalorder %s17, 1
    %p77 = por %p75, %p76
    %p78 = scmp.ne.s32.totalorder %s67, %s68
    %p79 = scmp.eq.s32.totalorder %s17, 0
    %p80 = por %p78, %p79
    %p81 = scmp.ne.s32.totalorder %s67, %s68
    %p82 = scmp.eq.s32.totalorder %s18, 1
    %p83 = por %p81, %p82
    %p85 = scmp.ne.s32.totalorder %s68, %s84
    %p86 = scmp.eq.s32.totalorder %s18, 0
    %p87 = por %p85, %p86
    %s88 = ssub.s32 %s19, %s38
    %s89 = ssub.s32 %s21, %s30
    %s90 = sor.u32 %s88, %s89
    %p91 = scmp.eq.s32.totalorder %s90, 0
    %s93 = sadd.s32 %s92, 1
    %s94 = scalar_select %p91, %s92, %s93
    %p97 = pneg %p91
    %p98 = scmp.eq.s32.totalorder %s12, 1
    %p99 = por %p97, %p98
    %p100 = scmp.ne.s32.totalorder %s92, %s95
    %p101 = scmp.eq.s32.totalorder %s12, 0
    %p102 = por %p100, %p101
    %p103 = scmp.ne.s32.totalorder %s92, %s95
    %p104 = scmp.eq.s32.totalorder %s17, 1
    %p105 = por %p103, %p104
    %p106 = scmp.ne.s32.totalorder %s95, %s96
    %p107 = scmp.eq.s32.totalorder %s17, 0
    %p108 = por %p106, %p107
    %p109 = scmp.ne.s32.totalorder %s95, %s96
    %p110 = scmp.eq.s32.totalorder %s18, 1
    %p111 = por %p109, %p110
    %p113 = scmp.ne.s32.totalorder %s96, %s112
    %p114 = scmp.eq.s32.totalorder %s18, 0
    %p115 = por %p113, %p114
    %s116 = ssub.s32 %s19, %s38
    %s117 = ssub.s32 %s20, %s34
    %s118 = sor.u32 %s116, %s117
    %p119 = scmp.eq.s32.totalorder %s118, 0
    %s121 = sadd.s32 %s120, 1
    %s122 = scalar_select %p119, %s120, %s121
    %p125 = pneg %p119
    %p126 = scmp.eq.s32.totalorder %s12, 1
    %p127 = por %p125, %p126
    %p128 = scmp.ne.s32.totalorder %s120, %s123
    %p129 = scmp.eq.s32.totalorder %s12, 0
    %p130 = por %p128, %p129
    %p131 = scmp.ne.s32.totalorder %s120, %s123
    %p132 = scmp.eq.s32.totalorder %s17, 1
    %p133 = por %p131, %p132
    %p134 = scmp.ne.s32.totalorder %s123, %s124
    %p135 = scmp.eq.s32.totalorder %s17, 0
    %p136 = por %p134, %p135
    %p137 = scmp.ne.s32.totalorder %s123, %s124
    %p138 = scmp.eq.s32.totalorder %s18, 1
    %p139 = por %p137, %p138
    %p141 = scmp.ne.s32.totalorder %s124, %s140
    %p142 = scmp.eq.s32.totalorder %s18, 0
    %p143 = por %p141, %p142
    %s144 = ssub.s32 %s19, %s38
    %s145 = ssub.s32 %s21, %s30
    %s146 = sor.u32 %s144, %s145
    %p147 = scmp.eq.s32.totalorder %s146, 0
    %s149 = sadd.s32 %s148, 1
    %s150 = scalar_select %p147, %s148, %s149
    %p153 = pneg %p147
    %p154 = scmp.eq.s32.totalorder %s12, 1
    %p155 = por %p153, %p154
    %p156 = scmp.ne.s32.totalorder %s148, %s151
    %p157 = scmp.eq.s32.totalorder %s12, 0
    %p158 = por %p156, %p157
    %p159 = scmp.ne.s32.totalorder %s148, %s151
    %p160 = scmp.eq.s32.totalorder %s17, 1
    %p161 = por %p159, %p160
    %p162 = scmp.ne.s32.totalorder %s151, %s152
    %p163 = scmp.eq.s32.totalorder %s17, 0
    %p164 = por %p162, %p163
    %p165 = scmp.ne.s32.totalorder %s151, %s152
    %p166 = scmp.eq.s32.totalorder %s18, 1
    %p167 = por %p165, %p166
    %p169 = scmp.ne.s32.totalorder %s152, %s168
    %p170 = scmp.eq.s32.totalorder %s18, 0
    %p171 = por %p169, %p170
    %s172 = ssub.s32 %s19, %s38
    %s173 = ssub.s32 %s20, %s34
    %s174 = sor.u32 %s172, %s173
    %s175 = ssub.s32 %s21, %s30
    %s176 = sor.u32 %s174, %s175
    %p177 = scmp.eq.s32.totalorder %s176, 0
    %s179 = sadd.s32 %s178, 1
    %s180 = scalar_select %p177, %s178, %s179
    %p183 = pneg %p177
    %p184 = scmp.eq.s32.totalorder %s12, 1
    %p185 = por %p183, %p184
    %p186 = scmp.ne.s32.totalorder %s178, %s181
    %p187 = scmp.eq.s32.totalorder %s12, 0
    %p188 = por %p186, %p187
    %p189 = scmp.ne.s32.totalorder %s178, %s181
    %p190 = scmp.eq.s32.totalorder %s17, 1
    %p191 = por %p189, %p190
    %p192 = scmp.ne.s32.totalorder %s181, %s182
    %p193 = scmp.eq.s32.totalorder %s17, 0
    %p194 = por %p192, %p193
    %p195 = scmp.ne.s32.totalorder %s181, %s182
    %p196 = scmp.eq.s32.totalorder %s18, 1
    %p197 = por %p195, %p196
    %p199 = scmp.ne.s32.totalorder %s182, %s198
    %p200 = scmp.eq.s32.totalorder %s18, 0
    %p201 = por %p199, %p200
    %p202 = scmp.le.s32.totalorder 1, %s12
    %p203 = scmp.lt.s32.totalorder %s12, 3
    %p204 = pnand %p202, %p203
    %p205 = pneg %p204
    // Predicated region
    $region9: #{proto_euclidean.1} parent=5 // pred_check
      _
    $region10: #{proto_euclidean.1} parent=5 // pred_check_branch
      %207 = sbr.rel (%p204) target = $region12
    $region11: #{proto_euclidean.1} parent=5 // pred_region
      %s208 = ssub.s32 %s12, 1
      // Predicated region
      $region13: #{proto_euclidean.1} parent=11 // pred_check
        %p209 = pneg %p52
      $region14: #{proto_euclidean.1} parent=11 // pred_check_branch
        %211 = sbr.rel (%p209) target = $region16
      $region15: #{proto_euclidean.1} parent=11 // pred_region
        _
      $region16: #{proto_euclidean.1} parent=11 // pred_fallthru
        _
    $region12: #{proto_euclidean.1} parent=5 // pred_fallthru
      _
    %p212 = scmp.lt.s32.totalorder %s12, 2
    // Predicated region
    $region17: #{proto_euclidean.1} parent=5 // pred_check
      %p213 = pneg %p212
    $region18: #{proto_euclidean.1} parent=5 // pred_check_branch
      %215 = sbr.rel (%p213) target = $region20
    $region19: #{proto_euclidean.1} parent=5 // pred_region
      // Predicated region
      $region21: #{proto_euclidean.1} parent=19 // pred_check
        %p216 = pneg %p74
      $region22: #{proto_euclidean.1} parent=19 // pred_check_branch
        %218 = sbr.rel (%p216) target = $region24
      $region23: #{proto_euclidean.1} parent=19 // pred_region
        %s219 = smul.u32 2, %s20
        %p220 = scmp.lt.s32.totalorder %s19, 1
        %s221 = scalar_select %p220, %s19, 1
        %p222 = scmp.lt.s32.totalorder %s219, 1
        %s223 = scalar_select %p222, %s219, 1
        %s224 = smul.addr %s221, 2
        %s225 = sadd.s32 %s223, %s224
        %s226 = smul.addr %s225, 8
        %s227 = scalar_lea.vmem %s1, %s226
        %s228 = smul.u32 2, %s20
      $region24: #{proto_euclidean.1} parent=19 // pred_fallthru
        _
      // Predicated region
      $region25: #{proto_euclidean.1} parent=19 // pred_check
        %p229 = pneg %p102
      $region26: #{proto_euclidean.1} parent=19 // pred_check_branch
        %231 = sbr.rel (%p229) target = $region28
      $region27: #{proto_euclidean.1} parent=19 // pred_region
        %s232 = smul.u32 16, %s21
        %p233 = scmp.lt.s32.totalorder %s19, 1
        %s234 = scalar_select %p233, %s19, 1
        %p235 = scmp.lt.s32.totalorder %s232, 15
        %s236 = scalar_select %p235, %s232, 15
        %s237 = smul.addr %s234, 16
        %s238 = sadd.s32 %s236, %s237
        %s239 = smul.addr %s238, 8
        %s240 = scalar_lea.vmem %s2, %s239
        %s241 = smul.u32 16, %s21
      $region28: #{proto_euclidean.1} parent=19 // pred_fallthru
        _
      // Predicated region
      $region29: #{proto_euclidean.1} parent=19 // pred_check
        %p242 = pneg %p130
      $region30: #{proto_euclidean.1} parent=19 // pred_check_branch
        %244 = sbr.rel (%p242) target = $region32
      $region31: #{proto_euclidean.1} parent=19 // pred_region
        %s245 = smul.u32 2, %s20
        %p246 = scmp.lt.s32.totalorder %s19, 1
        %s247 = scalar_select %p246, %s19, 1
        %p248 = scmp.lt.s32.totalorder %s245, 1
        %s249 = scalar_select %p248, %s245, 1
        %s250 = smul.addr %s247, 2
        %s251 = sadd.s32 %s249, %s250
        %s252 = smul.addr %s251, 8
        %s253 = scalar_lea.vmem %s3, %s252
        %s254 = smul.u32 2, %s20
      $region32: #{proto_euclidean.1} parent=19 // pred_fallthru
        _
      // Predicated region
      $region33: #{proto_euclidean.1} parent=19 // pred_check
        %p255 = pneg %p158
      $region34: #{proto_euclidean.1} parent=19 // pred_check_branch
        %257 = sbr.rel (%p255) target = $region36
      $region35: #{proto_euclidean.1} parent=19 // pred_region
        %p258 = scmp.lt.s32.totalorder %s19, 1
        %s259 = scalar_select %p258, %s19, 1
        %p260 = scmp.lt.s32.totalorder %s21, 0
        %s261 = scalar_select %p260, %s21, 0
        %s262 = sadd.s32 %s261, %s259
        %s263 = scalar_lea.vmem %s4, %s262
      $region36: #{proto_euclidean.1} parent=19 // pred_fallthru
        _
    $region20: #{proto_euclidean.1} parent=5 // pred_fallthru
      _
    %p264 = scmp.le.s32.totalorder 1, %s12
    %p265 = scmp.lt.s32.totalorder %s12, 3
    %p266 = pnand %p264, %p265
    %p267 = pneg %p266
    // Predicated region
    $region37: #{proto_euclidean.1} parent=5 // pred_check
      _
    $region38: #{proto_euclidean.1} parent=5 // pred_check_branch
      %269 = sbr.rel (%p266) target = $region40
    $region39: #{proto_euclidean.1} parent=5 // pred_region
      %s270 = ssub.s32 %s12, 1
      %p271 = pneg %p52
      %p272 = pneg %p49
      %s273 = smul.u32 2, %s23
      %p274 = scmp.lt.s32.totalorder %s22, 1
      %s275 = scalar_select %p274, %s22, 1
      %p276 = scmp.lt.s32.totalorder %s273, 1
      %s277 = scalar_select %p276, %s273, 1
      %s278 = smul.addr %s275, 2
      %s279 = sadd.s32 %s277, %s278
      %s280 = smul.addr %s279, 8
      %s281 = scalar_lea.vmem %s1, %s280
      %p282 = pneg %p80
      %p283 = pneg %p77
      %s284 = smul.u32 16, %s24
      %p285 = scmp.lt.s32.totalorder %s22, 1
      %s286 = scalar_select %p285, %s22, 1
      %p287 = scmp.lt.s32.totalorder %s284, 15
      %s288 = scalar_select %p287, %s284, 15
      %s289 = smul.addr %s286, 16
      %s290 = sadd.s32 %s288, %s289
      %s291 = smul.addr %s290, 8
      %s292 = scalar_lea.vmem %s2, %s291
      %p293 = pneg %p108
      %p294 = pneg %p105
      %s295 = smul.u32 2, %s23
      %p296 = scmp.lt.s32.totalorder %s22, 1
      %s297 = scalar_select %p296, %s22, 1
      %p298 = scmp.lt.s32.totalorder %s295, 1
      %s299 = scalar_select %p298, %s295, 1
      %s300 = smul.addr %s297, 2
      %s301 = sadd.s32 %s299, %s300
      %s302 = smul.addr %s301, 8
      %s303 = scalar_lea.vmem %s3, %s302
      %p304 = pneg %p136
      %p305 = pneg %p133
      %p306 = scmp.lt.s32.totalorder %s22, 1
      %s307 = scalar_select %p306, %s22, 1
      %p308 = scmp.lt.s32.totalorder %s24, 0
      %s309 = scalar_select %p308, %s24, 0
      %s310 = sadd.s32 %s309, %s307
      %s311 = scalar_lea.vmem %s4, %s310
      %p312 = pneg %p164
      %p313 = pneg %p161
      %p314 = pneg %p194
      %p315 = pneg %p191
      %s316 = smul.u32 2, %s23
      %p317 = scmp.lt.s32.totalorder %s22, 1
      %s318 = scalar_select %p317, %s22, 1
      %p319 = scmp.lt.s32.totalorder %s316, 1
      %s320 = scalar_select %p319, %s316, 1
      %p321 = scmp.lt.s32.totalorder %s24, 0
      %s322 = scalar_select %p321, %s24, 0
      %s323 = sadd.s32 %s322, %s320
      %s324 = smul.addr %s318, 2
      %s325 = sadd.s32 %s323, %s324
      %s326 = smul.addr %s325, 8
      %s327 = scalar_lea.vmem %s5, %s326
      %s328 = smul.u32 2, %s23
      %p329 = scmp.lt.s32.totalorder %s22, 1
      %s330 = scalar_select %p329, %s22, 1
      %p331 = scmp.lt.s32.totalorder %s328, 1
      %s332 = scalar_select %p331, %s328, 1
      %s333 = smul.addr %s330, 2
      %s334 = sadd.s32 %s332, %s333
      %s335 = smul.addr %s334, 8
      %s336 = scalar_lea.vmem %s1, %s335
      %s337 = smul.u32 2, %s23
      %s338 = smul.u32 16, %s24
      %p339 = scmp.lt.s32.totalorder %s22, 1
      %s340 = scalar_select %p339, %s22, 1
      %p341 = scmp.lt.s32.totalorder %s338, 15
      %s342 = scalar_select %p341, %s338, 15
      %s343 = smul.addr %s340, 16
      %s344 = sadd.s32 %s342, %s343
      %s345 = smul.addr %s344, 8
      %s346 = scalar_lea.vmem %s2, %s345
      %s347 = smul.u32 16, %s24
      %s348 = smul.u32 2, %s23
      %p349 = scmp.lt.s32.totalorder %s22, 1
      %s350 = scalar_select %p349, %s22, 1
      %p351 = scmp.lt.s32.totalorder %s348, 1
      %s352 = scalar_select %p351, %s348, 1
      %s353 = smul.addr %s350, 2
      %s354 = sadd.s32 %s352, %s353
      %s355 = smul.addr %s354, 8
      %s356 = scalar_lea.vmem %s3, %s355
      %s357 = smul.u32 2, %s23
      %p358 = scmp.lt.s32.totalorder %s22, 1
      %s359 = scalar_select %p358, %s22, 1
      %p360 = scmp.lt.s32.totalorder %s24, 0
      %s361 = scalar_select %p360, %s24, 0
      %s362 = sadd.s32 %s361, %s359
      %s363 = scalar_lea.vmem %s4, %s362
      %s364 = smul.u32 2, %s23
      %p365 = scmp.lt.s32.totalorder %s22, 1
      %s366 = scalar_select %p365, %s22, 1
      %p367 = scmp.lt.s32.totalorder %s364, 1
      %s368 = scalar_select %p367, %s364, 1
      %p369 = scmp.lt.s32.totalorder %s24, 0
      %s370 = scalar_select %p369, %s24, 0
      %s371 = sadd.s32 %s370, %s368
      %s372 = smul.addr %s366, 2
      %s373 = sadd.s32 %s371, %s372
      %s374 = smul.addr %s373, 8
      %s375 = scalar_lea.vmem %s5, %s374
      %s376 = smul.u32 2, %s23
      %v377 = vld [vmem:[%s336] sm:$0xff]
      %v378 = vld [vmem:[%s336 + $0x8] sm:$0xff]
      %v379 = vld [vmem:[%s346] sm:$0xff]
      %v380 = vld [vmem:[%s346 + $0x8] sm:$0xff]
      %v381 = vld [vmem:[%s346 + $0x10] sm:$0xff]
      %v382 = vld [vmem:[%s346 + $0x18] sm:$0xff]
      %v383 = vld [vmem:[%s346 + $0x20] sm:$0xff]
      %v384 = vld [vmem:[%s346 + $0x28] sm:$0xff]
      %v385 = vld [vmem:[%s346 + $0x30] sm:$0xff]
      %v386 = vld [vmem:[%s346 + $0x38] sm:$0xff]
      %v387 = vld [vmem:[%s346 + $0x40] sm:$0xff]
      %v388 = vld [vmem:[%s346 + $0x48] sm:$0xff]
      %v389 = vld [vmem:[%s346 + $0x50] sm:$0xff]
      %v390 = vld [vmem:[%s346 + $0x58] sm:$0xff]
      %v391 = vld [vmem:[%s346 + $0x60] sm:$0xff]
      %v392 = vld [vmem:[%s346 + $0x68] sm:$0xff]
      %v393 = vld [vmem:[%s346 + $0x70] sm:$0xff]
      %v394 = vld [vmem:[%s346 + $0x78] sm:$0xff]
      %vm395 = vcmask 523264
      %v397 = vsel %vm395, %v377, 0
      %v400 = vsel %vm395, %v378, 0
      %v403 = vsel %vm395, %v379, 0
      %v406 = vsel %vm395, %v380, 0
      %v409 = vsel %vm395, %v381, 0
      %v412 = vsel %vm395, %v382, 0
      %v415 = vsel %vm395, %v383, 0
      %v418 = vsel %vm395, %v384, 0
      %v421 = vsel %vm395, %v385, 0
      %v424 = vsel %vm395, %v386, 0
      %v427 = vsel %vm395, %v387, 0
      %v430 = vsel %vm395, %v388, 0
      %v433 = vsel %vm395, %v389, 0
      %v436 = vsel %vm395, %v390, 0
      %v439 = vsel %vm395, %v391, 0
      %v442 = vsel %vm395, %v392, 0
      %v445 = vsel %vm395, %v393, 0
      %v448 = vsel %vm395, %v394, 0
      %450 = vmatprep.subr.mxu0 0.0
      %451 = vmatpush1.xpose.msra.mxu0 %v403
      %452 = vmatprep.subr.mxu0 0.0
      %453 = vmatpush1.xpose.msra.mxu0 %v406
      %454 = vmatprep.subr.mxu0 0.0
      %455 = vmatpush1.xpose.msra.mxu0 %v409
      %456 = vmatprep.subr.mxu0 0.0
      %457 = vmatpush1.xpose.msra.mxu0 %v412
      %458 = vmatprep.subr.mxu0 0.0
      %459 = vmatpush1.xpose.msra.mxu0 %v415
      %460 = vmatprep.subr.mxu0 0.0
      %461 = vmatpush1.xpose.msra.mxu0 %v418
      %462 = vmatprep.subr.mxu0 0.0
      %463 = vmatpush1.xpose.msra.mxu0 %v421
      %464 = vmatprep.subr.mxu0 0.0
      %465 = vmatpush1.xpose.msra.mxu0 %v424
      %466 = vmatprep.subr.mxu0 0.0
      %467 = vmatpush1.xpose.msra.mxu0 %v427
      %468 = vmatprep.subr.mxu0 0.0
      %469 = vmatpush1.xpose.msra.mxu0 %v430
      %470 = vmatprep.subr.mxu0 0.0
      %471 = vmatpush1.xpose.msra.mxu0 %v433
      %472 = vmatprep.subr.mxu0 0.0
      %473 = vmatpush1.xpose.msra.mxu0 %v436
      %474 = vmatprep.subr.mxu0 0.0
      %475 = vmatpush1.xpose.msra.mxu0 %v439
      %476 = vmatprep.subr.mxu0 0.0
      %477 = vmatpush1.xpose.msra.mxu0 %v442
      %478 = vmatprep.subr.mxu0 0.0
      %479 = vmatpush1.xpose.msra.mxu0 %v445
      %480 = vmatprep.subr.mxu0 0.0
      %481 = vmatpush1.xpose.msra.mxu0 %v448
      %482 = vmatprep.subr.mxu0 0.0
      %483 = vmatpush1.xpose.msra.mxu0 0.0
      %484 = vmatprep.subr.mxu0 0.0
      %485 = vmatpush1.xpose.msra.mxu0 0.0
      %486 = vmatprep.subr.mxu0 0.0
      %487 = vmatpush1.xpose.msra.mxu0 0.0
      %488 = vmatprep.subr.mxu0 0.0
      %489 = vmatpush1.xpose.msra.mxu0 0.0
      %490 = vmatprep.subr.mxu0 0.0
      %491 = vmatpush1.xpose.msra.mxu0 0.0
      %492 = vmatprep.subr.mxu0 0.0
      %493 = vmatpush1.xpose.msra.mxu0 0.0
      %494 = vmatprep.subr.mxu0 0.0
      %495 = vmatpush1.xpose.msra.mxu0 0.0
      %496 = vmatprep.subr.mxu0 0.0
      %497 = vmatpush1.xpose.msra.mxu0 0.0
      %498 = vmatprep.subr.mxu0 0.0
      %499 = vmatpush1.xpose.msra.mxu0 0.0
      %500 = vmatprep.subr.mxu0 0.0
      %501 = vmatpush1.xpose.msra.mxu0 0.0
      %502 = vmatprep.subr.mxu0 0.0
      %503 = vmatpush1.xpose.msra.mxu0 0.0
      %504 = vmatprep.subr.mxu0 0.0
      %505 = vmatpush1.xpose.msra.mxu0 0.0
      %506 = vmatprep.subr.mxu0 0.0
      %507 = vmatpush1.xpose.msra.mxu0 0.0
      %508 = vmatprep.subr.mxu0 0.0
      %509 = vmatpush1.xpose.msra.mxu0 0.0
      %510 = vmatprep.subr.mxu0 0.0
      %511 = vmatpush1.xpose.msra.mxu0 0.0
      %512 = vmatprep.subr.mxu0 0.0
      %513 = vmatpush1.xpose.msra.mxu0 0.0
      %514 = vmatprep.mubr.f32.mxu0 0.0
      %515 = vmatmul.mubr.f32.gmra.mrb[0].mxu0 %v397
      %v516 = vpop.f32.mrb[0].mxu0
      %v517 = vadd.f32 0.0, %v516
      %v518 = vpop.f32.mrb[0].mxu0
      %519 = vmatprep.mubr.f32.mxu0 0.0
      %520 = vmatmul.mubr.f32.gmra.mrb[0].mxu0 %v400
      %v521 = vpop.f32.mrb[0].mxu0
      %v522 = vadd.f32 0.0, %v521
      %v523 = vpop.f32.mrb[0].mxu0
      %524 = vdwg.mxu0
      %s525 = sld [smem:[#allocation2]]
      %s526 = smul.f32 %s525, 2.0
      %v527 = vstv %s526
      %v528 = vmul.f32 %v527, %v517
      %v529 = vmul.f32 %v527, %v522
      %v530 = vld [vmem:[%s356] sm:$0xff]
      %v531 = vld [vmem:[%s356 + $0x8] sm:$0xff]
      %533 = vset.pattern.permute.xlu0 0
      %534 = vperm.xlu0 %533, %v530
      %v535 = vpop.permute.xlu0 %534
      %538 = vset.pattern.permute.xlu0 0
      %539 = vperm.xlu0 %538, %v531
      %v540 = vpop.permute.xlu0 %539
      %v542 = vsub.f32 %v528, %v535
      %v543 = vsub.f32 %v529, %v540
      %v544 = vld [vmem:[%s363] sm:$0x1]
      %v546 = vlaneseq
      %v547 = vshrl.u32 %v546, 7
      %v548 = vsub.s32 0, %v547
      %v549 = vrot.slane %v544, %v548
      %v551 = vsub.f32 %v542, %v549
      %v552 = vsub.f32 %v543, %v549
      %553 = vst [vmem:[%s375] sm:$0xff] %v551
      %554 = vst [vmem:[%s375 + $0x8] sm:$0xff] %v552
      %s555 = smul.u32 2, %s23
      %p556 = scmp.lt.s32.totalorder %s22, 1
      %s557 = scalar_select %p556, %s22, 1
      %p558 = scmp.lt.s32.totalorder %s555, 1
      %s559 = scalar_select %p558, %s555, 1
      %p560 = scmp.lt.s32.totalorder %s24, 0
      %s561 = scalar_select %p560, %s24, 0
      %s562 = sadd.s32 %s561, %s559
      %s563 = smul.addr %s557, 2
      %s564 = sadd.s32 %s562, %s563
      %s565 = smul.addr %s564, 8
      %s566 = scalar_lea.vmem %s5, %s565
      // Predicated region
      $region41: #{proto_euclidean.1} parent=39 // pred_check
        %p567 = pneg %p191
      $region42: #{proto_euclidean.1} parent=39 // pred_check_branch
        %569 = sbr.rel (%p567) target = $region44
      $region43: #{proto_euclidean.1} parent=39 // pred_region
        %s570 = smul.u32 2, %s23
      $region44: #{proto_euclidean.1} parent=39 // pred_fallthru
        _
    $region40: #{proto_euclidean.1} parent=5 // pred_fallthru
      _
    %p571 = scmp.le.s32.totalorder 2, %s12
    // Predicated region
    $region45: #{proto_euclidean.1} parent=5 // pred_check
      %p572 = pneg %p571
    $region46: #{proto_euclidean.1} parent=5 // pred_check_branch
      %574 = sbr.rel (%p572) target = $region48
    $region47: #{proto_euclidean.1} parent=5 // pred_region
      %s575 = ssub.s32 %s12, 2
      // Predicated region
      $region49: #{proto_euclidean.1} parent=47 // pred_check
        %p576 = pneg %p197
      $region50: #{proto_euclidean.1} parent=47 // pred_check_branch
        %578 = sbr.rel (%p576) target = $region52
      $region51: #{proto_euclidean.1} parent=47 // pred_region
        %s579 = smul.u32 2, %s26
        %p580 = scmp.lt.s32.totalorder %s25, 1
        %s581 = scalar_select %p580, %s25, 1
        %p582 = scmp.lt.s32.totalorder %s579, 1
        %s583 = scalar_select %p582, %s579, 1
        %p584 = scmp.lt.s32.totalorder %s27, 0
        %s585 = scalar_select %p584, %s27, 0
        %s586 = sadd.s32 %s585, %s583
        %s587 = smul.addr %s581, 2
        %s588 = sadd.s32 %s586, %s587
        %s589 = smul.addr %s588, 8
        %s590 = scalar_lea.vmem %s5, %s589
      $region52: #{proto_euclidean.1} parent=47 // pred_fallthru
        _
    $region48: #{proto_euclidean.1} parent=5 // pred_fallthru
      _
  $region6: #{proto_euclidean.1} parent=0 // loop_footer
    %s16 = sadd.s32 1, %s12
  $region7: #{proto_euclidean.1} parent=0 // loop_footer_branch
    %11 = sbr.rel target = $region3
  $region8: #{proto_euclidean.1} parent=0 // loop_exit
    _

</llo_original>
